<compile_context>
chip_gen: v6e
topology: v6e:2x2x1
jax: 0.10.0
libtpu: 0.0.40
codegen_flags: <defaults>
</compile_context>

<pallas_src>
import math
import functools

import jax
import jax.numpy as jnp
from jax.experimental import pallas as pl
from jax.experimental.pallas import tpu as pltpu


# ----------------------------------------------------------------------------
# Kernel: one row-tile of the Output block.
#   h_ref   : (TM, I)  activations from Intermediate
#   res_ref : (TM, H)  residual input_tensor
#   w_ref   : (I,  H)  dense weight (bf16, [in, out])
#   b_ref   : (1,  H)  dense bias (f32)
#   g_ref   : (1,  H)  LayerNorm gamma (f32)
#   be_ref  : (1,  H)  LayerNorm beta  (f32)
#   o_ref   : (TM, H)  output
# ----------------------------------------------------------------------------
def _output_kernel(h_ref, res_ref, w_ref, b_ref, g_ref, be_ref, o_ref, *, eps):
    # MXU matmul with bf16 operands, f32 accumulator.
    h_bf = h_ref[...].astype(jnp.bfloat16)                      # (TM, I)
    y = jnp.dot(h_bf, w_ref[...], preferred_element_type=jnp.float32)  # (TM, H)

    # Dropout is identity (inference). Fused bias + residual in f32.
    x = y + b_ref[0] + res_ref[...].astype(jnp.float32)

    # LayerNorm (biased variance, eps=1e-12), all in f32.
    u = jnp.mean(x, axis=-1, keepdims=True)
    d = x - u
    s = jnp.mean(d * d, axis=-1, keepdims=True)
    out = g_ref[0] * (d * jax.lax.rsqrt(s + eps)) + be_ref[0]

    o_ref[...] = out.astype(o_ref.dtype)


def _round_up(x, m):
    return ((x + m - 1) // m) * m


def output_forward(hidden_states, input_tensor, weight, bias, gamma, beta,
                   *, eps=1e-12, block_rows=512):
    """Forward pass of the `Output` module.

    hidden_states : (..., I)   activations from Intermediate
    input_tensor  : (..., H)   residual connection
    weight        : (I, H)     dense weight, stored as [in, out]
    bias, gamma, beta : (1, H)
    """
    I = hidden_states.shape[-1]
    H = input_tensor.shape[-1]
    out_shape_full = input_tensor.shape

    # Flatten all leading dims into a dense row axis.
    h2 = hidden_states.reshape(-1, I)
    r2 = input_tensor.reshape(-1, H)
    M = h2.shape[0]

    # Row tile: multiple of 8 (sublane) unless the whole array is smaller.
    tm = min(block_rows, _round_up(M, 8))
    Mp = _round_up(M, tm)
    if Mp != M:
        h2 = jnp.pad(h2, ((0, Mp - M), (0, 0)))
        r2 = jnp.pad(r2, ((0, Mp - M), (0, 0)))
    grid = (Mp // tm,)

    # bf16 weights: halves weight VMEM/HBM traffic, MXU-peak operand dtype.
    w_bf = weight.astype(jnp.bfloat16)

    const2d = lambda shape: pl.BlockSpec(shape, lambda i: (0, 0))
    in_specs = [
        pl.BlockSpec((tm, I), lambda i: (i, 0)),   # hidden_states tile
        pl.BlockSpec((tm, H), lambda i: (i, 0)),   # residual tile
        const2d((I, H)),                           # weight (resident)
        const2d((1, H)),                           # bias
        const2d((1, H)),                           # gamma
        const2d((1, H)),                           # beta
    ]
    out_spec = pl.BlockSpec((tm, H), lambda i: (i, 0))

    kernel = functools.partial(_output_kernel, eps=eps)

    out2 = pl.pallas_call(
        kernel,
        out_shape=jax.ShapeDtypeStruct((Mp, H), input_tensor.dtype),
        grid_spec=pltpu.PrefetchScalarGridSpec(
            num_scalar_prefetch=0,
            grid=grid,
            in_specs=in_specs,
            out_specs=out_spec,
        ),
        compiler_params=pltpu.CompilerParams(
            dimension_semantics=("parallel",),
            vmem_limit_bytes=48 * 1024 * 1024,   # > 32 MiB default, < v7x 64 MiB
        ),
    )(h2, r2, w_bf, bias, gamma, beta)

    return out2[:M].reshape(out_shape_full)


# ----------------------------------------------------------------------------
# Pure-JAX f32 reference (mirrors the PyTorch module) for validation.
# ----------------------------------------------------------------------------
def output_reference(hidden_states, input_tensor, weight, bias, gamma, beta,
                     eps=1e-12):
    y = jnp.dot(hidden_states, weight) + bias[0]
    x = y + input_tensor
    u = jnp.mean(x, axis=-1, keepdims=True)
    s = jnp.mean((x - u) ** 2, axis=-1, keepdims=True)
    xn = (x - u) / jnp.sqrt(s + eps)
    return gamma[0] * xn + beta[0]


if __name__ == "__main__":
    # Small shapes consistent with the module: Output(intermediate, hidden, p).
    intermediate_size = 64
    hidden_size = 32
    B, S = 2, 8

    root = jax.random.PRNGKey(0)
    k_h, k_r, k_w, k_b = jax.random.split(root, 4)

    hidden_states = jax.random.normal(k_h, (B, S, intermediate_size), jnp.float32)
    input_tensor = jax.random.normal(k_r, (B, S, hidden_size), jnp.float32)

    # nn.Linear default init (uniform +/- 1/sqrt(fan_in)); weight stored [in, out].
    bound = 1.0 / math.sqrt(intermediate_size)
    weight = jax.random.uniform(
        k_w, (intermediate_size, hidden_size), jnp.float32, -bound, bound)
    bias = jax.random.uniform(k_b, (1, hidden_size), jnp.float32, -bound, bound)
    gamma = jnp.ones((1, hidden_size), jnp.float32)
    beta = jnp.zeros((1, hidden_size), jnp.float32)

    out = output_forward(hidden_states, input_tensor, weight, bias, gamma, beta)
    out = jax.block_until_ready(out)

    ref = output_reference(hidden_states, input_tensor, weight, bias, gamma, beta)

    assert out.shape == (B, S, hidden_size)
    assert jnp.all(jnp.isfinite(out))
    # bf16 matmul operands -> small numeric deviation from the f32 reference.
    max_err = float(jnp.max(jnp.abs(out - ref)))
    assert max_err < 0.1, f"max abs error {max_err} too large"
    print("KERNEL_OK")
</pallas_src>

<mosaic_0001>
module attributes {stable_mosaic.version = 11 : i64} {
  func.func @_output_kernel(%arg0: i32, %arg1: memref<16x64xf32, #tpu.memory_space<vmem>>, %arg2: memref<16x32xf32, #tpu.memory_space<vmem>>, %arg3: memref<64x32xbf16, #tpu.memory_space<vmem>>, %arg4: memref<1x32xf32, #tpu.memory_space<vmem>>, %arg5: memref<1x32xf32, #tpu.memory_space<vmem>>, %arg6: memref<1x32xf32, #tpu.memory_space<vmem>>, %arg7: memref<16x32xf32, #tpu.memory_space<vmem>>) attributes {dimension_semantics = [#tpu.dimension_semantics<parallel>], iteration_bounds = array<i64: 1>, scalar_prefetch = 0 : i64, scratch_operands = 0 : i64, tpu.core_type = #tpu.core_type<tc>, window_params = [{transform_indices = @transform_0, window_bounds = array<i64: 16, 64>}, {transform_indices = @transform_1, window_bounds = array<i64: 16, 32>}, {pipeline_mode = #tpu.pipeline_mode<synchronous>, transform_indices = @transform_2, window_bounds = array<i64: 64, 32>}, {pipeline_mode = #tpu.pipeline_mode<synchronous>, transform_indices = @transform_3, window_bounds = array<i64: 1, 32>}, {pipeline_mode = #tpu.pipeline_mode<synchronous>, transform_indices = @transform_4, window_bounds = array<i64: 1, 32>}, {pipeline_mode = #tpu.pipeline_mode<synchronous>, transform_indices = @transform_5, window_bounds = array<i64: 1, 32>}, {transform_indices = @transform_6, window_bounds = array<i64: 16, 32>}]} {
    %c0 = arith.constant 0 : index
    %c0_0 = arith.constant 0 : index
    %0 = vector.load %arg1[%c0, %c0_0] : memref<16x64xf32, #tpu.memory_space<vmem>>, vector<16x64xf32>
    %1 = arith.truncf %0 : vector<16x64xf32> to vector<16x64xbf16>
    %c0_1 = arith.constant 0 : index
    %c0_2 = arith.constant 0 : index
    %2 = vector.load %arg3[%c0_1, %c0_2] : memref<64x32xbf16, #tpu.memory_space<vmem>>, vector<64x32xbf16>
    %cst = arith.constant dense<0.000000e+00> : vector<16x32xf32>
    %3 = tpu.matmul %1, %2, %cst {dimension_numbers = #tpu.dot_dimension_numbers<[1], [0], [0], [1], [0, 0, 1, 1], [], []>} : vector<16x64xbf16>, vector<64x32xbf16>, vector<16x32xf32> -> vector<16x32xf32>
    %c0_3 = arith.constant 0 : index
    %c0_4 = arith.constant 0 : index
    %4 = vector.load %arg4[%c0_3, %c0_4] : memref<1x32xf32, #tpu.memory_space<vmem>>, vector<1x32xf32>
    %5 = vector.shape_cast %4 : vector<1x32xf32> to vector<32xf32>
    %6 = vector.shape_cast %5 : vector<32xf32> to vector<1x32xf32>
    %7 = vector.broadcast %6 : vector<1x32xf32> to vector<16x32xf32>
    %8 = arith.addf %3, %7 : vector<16x32xf32>
    %c0_5 = arith.constant 0 : index
    %c0_6 = arith.constant 0 : index
    %9 = vector.load %arg2[%c0_5, %c0_6] : memref<16x32xf32, #tpu.memory_space<vmem>>, vector<16x32xf32>
    %10 = arith.addf %8, %9 : vector<16x32xf32>
    %cst_7 = arith.constant dense<0.000000e+00> : vector<16xf32>
    %11 = vector.multi_reduction <add>, %10, %cst_7 [1] : vector<16x32xf32> to vector<16xf32>
    %12 = vector.shape_cast %11 : vector<16xf32> to vector<16x1xf32>
    %cst_8 = arith.constant 3.200000e+01 : f32
    %13 = vector.broadcast %cst_8 : f32 to vector<16x1xf32>
    %14 = arith.divf %12, %13 : vector<16x1xf32>
    %15 = vector.broadcast %14 : vector<16x1xf32> to vector<16x32xf32>
    %16 = arith.subf %10, %15 : vector<16x32xf32>
    %17 = arith.mulf %16, %16 : vector<16x32xf32>
    %cst_9 = arith.constant dense<0.000000e+00> : vector<16xf32>
    %18 = vector.multi_reduction <add>, %17, %cst_9 [1] : vector<16x32xf32> to vector<16xf32>
    %19 = vector.shape_cast %18 : vector<16xf32> to vector<16x1xf32>
    %cst_10 = arith.constant 3.200000e+01 : f32
    %20 = vector.broadcast %cst_10 : f32 to vector<16x1xf32>
    %21 = arith.divf %19, %20 : vector<16x1xf32>
    %c0_11 = arith.constant 0 : index
    %c0_12 = arith.constant 0 : index
    %22 = vector.load %arg5[%c0_11, %c0_12] : memref<1x32xf32, #tpu.memory_space<vmem>>, vector<1x32xf32>
    %23 = vector.shape_cast %22 : vector<1x32xf32> to vector<32xf32>
    %cst_13 = arith.constant 9.99999996E-13 : f32
    %24 = vector.broadcast %cst_13 : f32 to vector<16x1xf32>
    %25 = arith.addf %21, %24 : vector<16x1xf32>
    %26 = math.rsqrt %25 : vector<16x1xf32>
    %27 = vector.broadcast %26 : vector<16x1xf32> to vector<16x32xf32>
    %28 = arith.mulf %16, %27 : vector<16x32xf32>
    %29 = vector.shape_cast %23 : vector<32xf32> to vector<1x32xf32>
    %30 = vector.broadcast %29 : vector<1x32xf32> to vector<16x32xf32>
    %31 = arith.mulf %30, %28 : vector<16x32xf32>
    %c0_14 = arith.constant 0 : index
    %c0_15 = arith.constant 0 : index
    %32 = vector.load %arg6[%c0_14, %c0_15] : memref<1x32xf32, #tpu.memory_space<vmem>>, vector<1x32xf32>
    %33 = vector.shape_cast %32 : vector<1x32xf32> to vector<32xf32>
    %34 = vector.shape_cast %33 : vector<32xf32> to vector<1x32xf32>
    %35 = vector.broadcast %34 : vector<1x32xf32> to vector<16x32xf32>
    %36 = arith.addf %31, %35 : vector<16x32xf32>
    %c0_16 = arith.constant 0 : index
    %c0_17 = arith.constant 0 : index
    %37 = vector.load %arg7[%c0_16, %c0_17] : memref<16x32xf32, #tpu.memory_space<vmem>>, vector<16x32xf32>
    tpu.vector_store %arg7[%c0_16, %c0_17], %36 {strides = array<i32>} : memref<16x32xf32, #tpu.memory_space<vmem>>, vector<16x32xf32>,
    return
  }
  func.func @transform_0(%arg0: i32) -> (i32, i32) {
    %c0_i32 = arith.constant 0 : i32
    %c0_i32_0 = arith.constant 0 : i32
    return %arg0, %c0_i32 : i32, i32
  }
  func.func @transform_1(%arg0: i32) -> (i32, i32) {
    %c0_i32 = arith.constant 0 : i32
    %c0_i32_0 = arith.constant 0 : i32
    return %arg0, %c0_i32 : i32, i32
  }
  func.func @transform_2(%arg0: i32) -> (i32, i32) {
    %c0_i32 = arith.constant 0 : i32
    %c0_i32_0 = arith.constant 0 : i32
    %c0_i32_1 = arith.constant 0 : i32
    return %c0_i32, %c0_i32_0 : i32, i32
  }
  func.func @transform_3(%arg0: i32) -> (i32, i32) {
    %c0_i32 = arith.constant 0 : i32
    %c0_i32_0 = arith.constant 0 : i32
    %c0_i32_1 = arith.constant 0 : i32
    return %c0_i32, %c0_i32_0 : i32, i32
  }
  func.func @transform_4(%arg0: i32) -> (i32, i32) {
    %c0_i32 = arith.constant 0 : i32
    %c0_i32_0 = arith.constant 0 : i32
    %c0_i32_1 = arith.constant 0 : i32
    return %c0_i32, %c0_i32_0 : i32, i32
  }
  func.func @transform_5(%arg0: i32) -> (i32, i32) {
    %c0_i32 = arith.constant 0 : i32
    %c0_i32_0 = arith.constant 0 : i32
    %c0_i32_1 = arith.constant 0 : i32
    return %c0_i32, %c0_i32_0 : i32, i32
  }
  func.func @transform_6(%arg0: i32) -> (i32, i32) {
    %c0_i32 = arith.constant 0 : i32
    %c0_i32_0 = arith.constant 0 : i32
    return %arg0, %c0_i32 : i32, i32
  }
}

</mosaic_0001>

<llo_original>
// kernel: tpu_custom_call.1
$region0: #{tpu_custom_call.1}
  #allocation0 [shape = 'u32[]', space=smem, size = 0x4, offset = 0x4, fixed_abs, tag = 'smem constant byte address 0x4 - core index']
  #allocation1 [shape = 'u32[144,128]{1,0:T(1,128)}', space=vmem, size = 0x12000, scoped, tag = 'internal scratch']
  %s0 = inlined_call_operand.vmem [shape: f32[16,64], index: 0, kind: input, shape index: {}]
  %s1 = inlined_call_operand.vmem [shape: f32[16,32], index: 1, kind: input, shape index: {}]
  %s2 = inlined_call_operand.vmem [shape: bf16[64,32], index: 2, kind: input, shape index: {}]
  %s3 = inlined_call_operand.vmem [shape: f32[1,32], index: 3, kind: input, shape index: {}]
  %s4 = inlined_call_operand.vmem [shape: f32[1,32], index: 4, kind: input, shape index: {}]
  %s5 = inlined_call_operand.vmem [shape: f32[1,32], index: 5, kind: input, shape index: {}]
  %s6 = inlined_call_operand.hbm [shape: f32[16,32], index: 6, kind: output, shape index: {}]
  %s7 = sld [smem:[#allocation0]]
  $region34: #{tpu_custom_call.1} parent=0
    _
  %s9 = ssub.s32 1, %s7
  %s10 = scalar_select 0, %s9, %s7
  $region1: #{tpu_custom_call.1} parent=0
    #allocation2 [shape = 'u8[8192]{0}', space=vmem, size = 0x2000, scoped, tag = 'output window, operand 0, single buffered']
    #allocation3 [shape = 's32[1]{0}', space=sflag, size = 0x4, scoped, tag = 'scoped memory for tpu_custom_call.1']
    %11 = vsyncpa [#allocation3], 0
    // Predicated region
    $region2: #{tpu_custom_call.1} parent=1 // pred_check
      _
    $region3: #{tpu_custom_call.1} parent=1 // pred_check_branch
      %13 = sbr.rel (0) target = $region5
    $region4: #{tpu_custom_call.1} parent=1 // pred_region
      _
    $region5: #{tpu_custom_call.1} parent=1 // pred_fallthru
      _
    // Predicated region
    $region6: #{tpu_custom_call.1} parent=1 // pred_check
      _
    $region7: #{tpu_custom_call.1} parent=1 // pred_check_branch
      %15 = sbr.rel (0) target = $region9
    $region8: #{tpu_custom_call.1} parent=1 // pred_region
      _
    $region9: #{tpu_custom_call.1} parent=1 // pred_fallthru
      _
    // Predicated region
    $region10: #{tpu_custom_call.1} parent=1 // pred_check
      _
    $region11: #{tpu_custom_call.1} parent=1 // pred_check_branch
      %17 = sbr.rel (0) target = $region13
    $region12: #{tpu_custom_call.1} parent=1 // pred_region
      _
    $region13: #{tpu_custom_call.1} parent=1 // pred_fallthru
      _
    // Predicated region
    $region14: #{tpu_custom_call.1} parent=1 // pred_check
      _
    $region15: #{tpu_custom_call.1} parent=1 // pred_check_branch
      %19 = sbr.rel (0) target = $region17
    $region16: #{tpu_custom_call.1} parent=1 // pred_region
      _
    $region17: #{tpu_custom_call.1} parent=1 // pred_fallthru
      _
    // Predicated region
    $region18: #{tpu_custom_call.1} parent=1 // pred_check
      _
    $region19: #{tpu_custom_call.1} parent=1 // pred_check_branch
      %21 = sbr.rel (0) target = $region21
    $region20: #{tpu_custom_call.1} parent=1 // pred_region
      _
    $region21: #{tpu_custom_call.1} parent=1 // pred_fallthru
      _
    // Predicated region
    $region22: #{tpu_custom_call.1} parent=1 // pred_check
      _
    $region23: #{tpu_custom_call.1} parent=1 // pred_check_branch
      %23 = sbr.rel (0) target = $region25
    $region24: #{tpu_custom_call.1} parent=1 // pred_region
      _
    $region25: #{tpu_custom_call.1} parent=1 // pred_fallthru
      _
    %v25 = vld [vmem:[%s0] sm:$0xff]
    %v26 = vld [vmem:[%s0 + $0x8] sm:$0xff]
    %v27 = vpack.c.bf16 %v26, %v25
    %v28 = vld [vmem:[%s2] sm:$0xf]
    %v29 = vld [vmem:[%s2 + $0x4] sm:$0xf]
    %v30 = vld [vmem:[%s2 + $0x8] sm:$0xf]
    %v31 = vld [vmem:[%s2 + $0xc] sm:$0xf]
    %v32 = vld [vmem:[%s2 + $0x10] sm:$0xf]
    %v33 = vld [vmem:[%s2 + $0x14] sm:$0xf]
    %v34 = vld [vmem:[%s2 + $0x18] sm:$0xf]
    %v35 = vld [vmem:[%s2 + $0x1c] sm:$0xf]
    %v36 = vld [vmem:[%s3] sm:$0x1]
    %v38 = vlaneseq
    %v39 = vshrl.u32 %v38, 7
    %v40 = vsub.s32 0, %v39
    %v41 = vrot.slane %v36, %v40
    %v51 = vunpack.c.l.b16 %v28
    %v52 = vunpack.c.l.b16 %v29
    %v53 = vunpack.c.l.b16 %v30
    %v54 = vunpack.c.l.b16 %v31
    %v55 = vunpack.c.l.b16 %v32
    %v56 = vunpack.c.l.b16 %v33
    %v57 = vunpack.c.l.b16 %v34
    %v58 = vunpack.c.l.b16 %v35
    %v59 = vpack.c.b16 %v52, %v51
    %v60 = vpack.c.b16 %v54, %v53
    %v61 = vpack.c.b16 %v56, %v55
    %v62 = vpack.c.b16 %v58, %v57
    %vm67 = vcmask 523264
    %v69 = vsel %vm67, %v27, 0
    %71 = vmatprep.subr.bf16.mxu0 0
    %72 = vmatpush1.bf16.msra.mxu0 0
    %73 = vmatprep.subr.bf16.mxu0 0
    %74 = vmatpush1.bf16.msra.mxu0 0
    %75 = vmatprep.subr.bf16.mxu0 0
    %76 = vmatpush1.bf16.msra.mxu0 0
    %77 = vmatprep.subr.bf16.mxu0 0
    %78 = vmatpush1.bf16.msra.mxu0 0
    %79 = vmatprep.subr.bf16.mxu0 0
    %80 = vmatpush1.bf16.msra.mxu0 %v62
    %81 = vmatprep.subr.bf16.mxu0 0
    %82 = vmatpush1.bf16.msra.mxu0 %v61
    %83 = vmatprep.subr.bf16.mxu0 0
    %84 = vmatpush1.bf16.msra.mxu0 %v60
    %85 = vmatprep.subr.bf16.mxu0 0
    %86 = vmatpush1.bf16.msra.mxu0 %v59
    %87 = vmatprep.subr.bf16.mxu0 0
    %88 = vmatpush2.bf16.msra.mxu0 0
    %89 = vmatprep.subr.bf16.mxu0 0
    %90 = vmatpush2.bf16.msra.mxu0 0
    %91 = vmatprep.subr.bf16.mxu0 0
    %92 = vmatpush2.bf16.msra.mxu0 0
    %93 = vmatprep.subr.bf16.mxu0 0
    %94 = vmatpush2.bf16.msra.mxu0 0
    %95 = vmatprep.subr.bf16.mxu0 0
    %96 = vmatpush2.bf16.msra.mxu0 0
    %97 = vmatprep.subr.bf16.mxu0 0
    %98 = vmatpush2.bf16.msra.mxu0 0
    %99 = vmatprep.subr.bf16.mxu0 0
    %100 = vmatpush2.bf16.msra.mxu0 0
    %101 = vmatprep.subr.bf16.mxu0 0
    %102 = vmatpush2.bf16.msra.mxu0 0
    %103 = vmatprep.mubr.bf16.mxu0 0
    %104 = vmatmul.mubr.bf16.gmra.mxu0 %v69
    %v105 = vpop.f32.mrf.mxu0
    %v106 = vadd.f32 %v41, %v105
    %v107 = vpop.f32.mrf.mxu0
    %v108 = vpop.f32.mrf.mxu0
    %v109 = vadd.f32 %v41, %v108
    %v110 = vpop.f32.mrf.mxu0
    %111 = vdwg.mxu0
    %v112 = vld [vmem:[%s1] sm:$0xff]
    %v113 = vld [vmem:[%s1 + $0x8] sm:$0xff]
    %v114 = vadd.f32 %v106, %v112
    %v115 = vadd.f32 %v109, %v113
    %vm116 = vcmask 261120
    %v117 = vsel %vm116, %v114, 0.0
    %118 = vadd.xlane.f32.xlu0 %v117
    %v119 = vpop.xlane.xlu0 %118
    %v120 = vsel %vm116, %v115, 0.0
    %121 = vadd.xlane.f32.xlu0 %v120
    %v122 = vpop.xlane.xlu0 %121
    %v123 = vrcp.pop 32.0
    %v124 = vmul.f32 %v119, %v123
    %v125 = vmul.f32 %v122, %v123
    %v126 = vsub.f32 %v114, %v124
    %v127 = vsub.f32 %v115, %v125
    %v128 = vmul.f32 %v126, %v126
    %v129 = vmul.f32 %v127, %v127
    %v130 = vsel %vm116, %v128, 0.0
    %131 = vadd.xlane.f32.xlu0 %v130
    %v132 = vpop.xlane.xlu0 %131
    %v133 = vsel %vm116, %v129, 0.0
    %134 = vadd.xlane.f32.xlu0 %v133
    %v135 = vpop.xlane.xlu0 %134
    %v136 = vmul.f32 %v132, %v123
    %v137 = vmul.f32 %v135, %v123
    %v138 = vld [vmem:[%s4] sm:$0x1]
    %v139 = vadd.f32 %v136, 1e-12
    %v140 = vadd.f32 %v137, 1e-12
    %v141 = vrsqrt.pop %v139
    %v142 = vrsqrt.pop %v140
    %v143 = vmul.f32 %v126, %v141
    %v144 = vmul.f32 %v127, %v142
    %v146 = vlaneseq
    %v147 = vshrl.u32 %v146, 7
    %v148 = vsub.s32 0, %v147
    %v149 = vrot.slane %v138, %v148
    %v151 = vmul.f32 %v149, %v143
    %v152 = vmul.f32 %v149, %v144
    %v153 = vld [vmem:[%s5] sm:$0x1]
    %v155 = vlaneseq
    %v156 = vshrl.u32 %v155, 7
    %v157 = vsub.s32 0, %v156
    %v158 = vrot.slane %v153, %v157
    %v160 = vadd.f32 %v151, %v158
    %v161 = vadd.f32 %v152, %v158
    %162 = vst.msk [vmem:[#allocation2] sm:$0xff] %vm116, %v160
    %163 = vst.msk [vmem:[#allocation2 + $0x8] sm:$0xff] %vm116, %v161
    // Predicated region
    $region26: #{tpu_custom_call.1} parent=1 // pred_check
      _
    $region27: #{tpu_custom_call.1} parent=1 // pred_check_branch
      %165 = sbr.rel (0) target = $region29
    $region28: #{tpu_custom_call.1} parent=1 // pred_region
      %s167 = ssub.s32 256, 256
      %168 = vsyncadd [#allocation3], %s167
      %s169 = sshll.u32 [#allocation2], 4
      %s170 = int_to_ptr.vmem [resolvable:$true] %s169
      %175 = dma.vmem_to_hbm [thread:$0]  %s170, 256, %s6, [#allocation3], 128, 128, 8
    $region29: #{tpu_custom_call.1} parent=1 // pred_fallthru
      _
    // Predicated region
    $region30: #{tpu_custom_call.1} parent=1 // pred_check
      _
    $region31: #{tpu_custom_call.1} parent=1 // pred_check_branch
      %177 = sbr.rel (0) target = $region33
    $region32: #{tpu_custom_call.1} parent=1 // pred_region
      %178 = dma.done [#allocation3], 256
    $region33: #{tpu_custom_call.1} parent=1 // pred_fallthru
      _
    %179 = vsyncpa [#allocation3], 1

</llo_original>
